<compile_context>
chip_gen: v7x
topology: tpu7x:2x2x1
jax: 0.10.0
libtpu: 0.0.40
codegen_flags: <defaults>
</compile_context>

<pallas_src>
import functools

import jax
import jax.numpy as jnp
from jax import lax
from jax.experimental import pallas as pl
from jax.experimental.pallas import tpu as pltpu


def _round_up(x, m):
    return ((x + m - 1) // m) * m


def _cdiv(a, b):
    return (a + b - 1) // b


def _pad_to(a, shape):
    return jnp.pad(a, [(0, t - s) for s, t in zip(a.shape, shape)])


# ---------------------------------------------------------------------------
# Kernel body: fused MLP forward for one (tb, *) batch tile.  All operands are
# VMEM-resident; matmuls hit the MXU with f32 accumulation; bias + ReLU stay
# in f32 (v5e-friendly) with a single cast back to the compute dtype per layer.
# ---------------------------------------------------------------------------
def _mlp_kernel(num_hidden_layers, *refs):
    if num_hidden_layers > 0:
        x_ref, w0_ref, b0_ref, wh_ref, bh_ref, wop_ref, bop_ref, out_ref = refs
    else:
        x_ref, w0_ref, b0_ref, wop_ref, bop_ref, out_ref = refs
        wh_ref = bh_ref = None

    compute_dtype = w0_ref.dtype

    # fc0
    h = jnp.dot(x_ref[...], w0_ref[...], preferred_element_type=jnp.float32)
    h = jnp.maximum(h + b0_ref[...], 0.0).astype(compute_dtype)

    # Hidden layers: stacked weights (L, H, H) / biases (L, 1, H), walked with
    # fori_loop so code size / vreg live ranges stay flat as L grows.
    if num_hidden_layers > 0:
        def body(l, h):
            acc = jnp.dot(h, wh_ref[l], preferred_element_type=jnp.float32)
            return jnp.maximum(acc + bh_ref[l], 0.0).astype(compute_dtype)

        h = lax.fori_loop(0, num_hidden_layers, body, h,
                          unroll=num_hidden_layers <= 8)

    # Output head (no activation); padded to 128 lanes -> unmasked store.
    out = jnp.dot(h, wop_ref[...], preferred_element_type=jnp.float32)
    out_ref[...] = (out + bop_ref[...]).astype(out_ref.dtype)


# ---------------------------------------------------------------------------
# One-time parameter packing (hoisted out of the per-call forward).
# ---------------------------------------------------------------------------
def prepare_params(params, num_layers, *, compute_dtype=jnp.bfloat16):
    """Pad/cast/stack torch-style Linear params into the kernel layout.

    params: flat list [w0, b0, (wi, bi)*num_layers, w_op, b_op]; weights are
            (in, out) float32, biases (1, out) float32.
    Zero padding is inert through matmul/ReLU (0*w = 0, ReLU(0) = 0).
    Call once; reuse the returned dict for every forward call.
    """
    # NOTE: an int8 hidden-weight path (per-channel scales folded into the f32
    # bias/ReLU epilogue) would ~2x MXU throughput on v5e/v6e only; v7x's MXU
    # has no int datapath, so it is intentionally not used here.
    num_states, hidden = params[0].shape
    sp = _round_up(num_states, 128)
    hp = _round_up(hidden, 128)
    ap = _round_up(params[-1].shape[-1], 128)

    packed = {
        "w0": _pad_to(params[0], (sp, hp)).astype(compute_dtype),
        "b0": _pad_to(params[1], (1, hp)).astype(jnp.float32),
        "wop": _pad_to(params[-2], (hp, ap)).astype(compute_dtype),
        "bop": _pad_to(params[-1], (1, ap)).astype(jnp.float32),
    }
    if num_layers > 0:
        packed["wh"] = jnp.stack(
            [_pad_to(params[2 + 2 * i], (hp, hp)) for i in range(num_layers)]
        ).astype(compute_dtype)
        packed["bh"] = jnp.stack(
            [_pad_to(params[3 + 2 * i], (1, hp)) for i in range(num_layers)]
        ).astype(jnp.float32)
    return packed


def _vmem_limit_bytes(tb, sp, hp, ap, L, compute_itemsize, out_itemsize):
    # Weights single-buffered (Buffered(1)); x/out tiles double-buffered.
    w_bytes = (sp * hp + L * hp * hp + hp * ap) * compute_itemsize
    b_bytes = (L + 2) * 8 * hp * 4                       # bias rows, sublane-padded
    io_bytes = 2 * tb * sp * compute_itemsize + 2 * tb * ap * out_itemsize
    scratch = 6 * tb * hp * 4                            # f32 intermediates headroom
    need = w_bytes + b_bytes + io_bytes + scratch
    return int(min(max(need * 5 // 4 + (4 << 20), 32 << 20), 64 << 20))


# ---------------------------------------------------------------------------
# Forward wrapper (jit-friendly; num_actions is a static Python int).
# ---------------------------------------------------------------------------
def simple_fc_policy_forward(x, packed, num_actions, *,
                             block_batch=512, out_dtype=jnp.float32):
    """Run the fused MLP Pallas kernel.  `packed` comes from prepare_params."""
    batch = x.shape[0]
    w0, b0 = packed["w0"], packed["b0"]
    wop, bop = packed["wop"], packed["bop"]
    has_hidden = "wh" in packed
    L = packed["wh"].shape[0] if has_hidden else 0
    compute_dtype = w0.dtype
    sp, hp = w0.shape
    ap = wop.shape[1]

    # --- batch tiling: even tiles; >= 2 tiles when batch allows so v7x's two
    # TensorCores both get work via dimension_semantics=("parallel",). -------
    bb = max(16, _round_up(block_batch, 16))             # bf16 sublane packing
    n_tiles = _cdiv(batch, bb)
    if batch >= 32:
        n_tiles = max(n_tiles, 2)
    tb = _round_up(_cdiv(batch, n_tiles), 16)
    pb = _round_up(batch, tb)
    grid = (pb // tb,)

    xp = _pad_to(x.astype(compute_dtype), (pb, sp))

    # Weights/biases: constant index_map -> DMA'd once, VMEM resident; single
    # buffer so never-changing blocks don't pay the double-buffer VMEM tax.
    def resident(shape):
        nd = len(shape)
        return pl.BlockSpec(shape, lambda i: (0,) * nd,
                            pipeline_mode=pl.Buffered(1))

    in_specs = [pl.BlockSpec((tb, sp), lambda i: (i, 0))]   # x tile (pipelined)
    operands = [xp]
    in_specs += [resident((sp, hp)), resident((1, hp))]
    operands += [w0, b0]
    if has_hidden:
        in_specs += [resident((L, hp, hp)), resident((L, 1, hp))]
        operands += [packed["wh"], packed["bh"]]
    in_specs += [resident((hp, ap)), resident((1, ap))]
    operands += [wop, bop]

    out = pl.pallas_call(
        functools.partial(_mlp_kernel, L),
        out_shape=jax.ShapeDtypeStruct((pb, ap), out_dtype),
        grid_spec=pltpu.PrefetchScalarGridSpec(
            num_scalar_prefetch=0,
            grid=grid,
            in_specs=in_specs,
            out_specs=pl.BlockSpec((tb, ap), lambda i: (i, 0)),
        ),
        compiler_params=pltpu.CompilerParams(
            dimension_semantics=("parallel",),              # megacore split on v7x
            vmem_limit_bytes=_vmem_limit_bytes(
                tb, sp, hp, ap, L,
                jnp.dtype(compute_dtype).itemsize,
                jnp.dtype(out_dtype).itemsize),
        ),
    )(*operands)

    return out[:batch, :num_actions]


# ---------------------------------------------------------------------------
# Helpers for the self-test.
# ---------------------------------------------------------------------------
def init_params(key, num_states, num_actions, num_layers):
    """Deterministic init mimicking torch.nn.Linear default (U[-1/sqrt(fan_in), +])."""
    dims = [(num_states, 200)] + [(200, 200)] * num_layers + [(200, num_actions)]
    params = []
    for (fan_in, fan_out) in dims:
        key, kw, kb = jax.random.split(key, 3)
        bound = 1.0 / jnp.sqrt(jnp.float32(fan_in))
        w = jax.random.uniform(kw, (fan_in, fan_out), jnp.float32, -bound, bound)
        b = jax.random.uniform(kb, (1, fan_out), jnp.float32, -bound, bound)
        params += [w, b]
    return params


def reference_forward(x, params, num_layers, compute_dtype=jnp.bfloat16):
    """Pure-JAX reference mirroring the kernel's bf16-operand / f32-accum math."""
    q = lambda a: a.astype(compute_dtype)
    h = jnp.dot(q(x), q(params[0]), preferred_element_type=jnp.float32)
    h = jnp.maximum(h + params[1], 0.0)
    for i in range(num_layers):
        h = jnp.dot(q(h), q(params[2 + 2 * i]), preferred_element_type=jnp.float32)
        h = jnp.maximum(h + params[3 + 2 * i], 0.0)
    out = jnp.dot(q(h), q(params[-2]), preferred_element_type=jnp.float32)
    return out + params[-1]


if __name__ == "__main__":
    num_states = 16
    num_actions = 8
    batch = 2

    key = jax.random.PRNGKey(0)
    key, kx = jax.random.split(key)
    x = jax.random.normal(kx, (batch, num_states), jnp.float32)

    for num_layers in (0, 1, 3):
        params = init_params(jax.random.fold_in(key, num_layers),
                             num_states, num_actions, num_layers)
        packed = prepare_params(params, num_layers)        # one-time pack
        fwd = jax.jit(functools.partial(simple_fc_policy_forward,
                                        num_actions=num_actions))
        out = jax.block_until_ready(fwd(x, packed))
        ref = reference_forward(x, params, num_layers)
        assert out.shape == (batch, num_actions)
        assert jnp.allclose(out, ref, atol=2e-3, rtol=2e-3), \
            f"mismatch vs reference (num_layers={num_layers})"

    print("KERNEL_OK")
</pallas_src>

<mosaic_0001>
module attributes {stable_mosaic.version = 11 : i64} {
  func.func @_mlp_kernel(%arg0: i32, %arg1: memref<16x128xbf16, #tpu.memory_space<vmem>>, %arg2: memref<128x256xbf16, #tpu.memory_space<vmem>>, %arg3: memref<1x256xf32, #tpu.memory_space<vmem>>, %arg4: memref<256x128xbf16, #tpu.memory_space<vmem>>, %arg5: memref<1x128xf32, #tpu.memory_space<vmem>>, %arg6: memref<16x128xf32, #tpu.memory_space<vmem>>) attributes {dimension_semantics = [#tpu.dimension_semantics<parallel>], iteration_bounds = array<i64: 1>, scalar_prefetch = 0 : i64, scratch_operands = 0 : i64, tpu.core_type = #tpu.core_type<tc>, window_params = [{transform_indices = @transform_0, window_bounds = array<i64: 16, 128>}, {pipeline_mode = #tpu.pipeline_mode<synchronous>, transform_indices = @transform_1, window_bounds = array<i64: 128, 256>}, {pipeline_mode = #tpu.pipeline_mode<synchronous>, transform_indices = @transform_2, window_bounds = array<i64: 1, 256>}, {pipeline_mode = #tpu.pipeline_mode<synchronous>, transform_indices = @transform_3, window_bounds = array<i64: 256, 128>}, {pipeline_mode = #tpu.pipeline_mode<synchronous>, transform_indices = @transform_4, window_bounds = array<i64: 1, 128>}, {transform_indices = @transform_5, window_bounds = array<i64: 16, 128>}]} {
    %c0 = arith.constant 0 : index
    %c0_0 = arith.constant 0 : index
    %0 = vector.load %arg1[%c0, %c0_0] : memref<16x128xbf16, #tpu.memory_space<vmem>>, vector<16x128xbf16>
    %c0_1 = arith.constant 0 : index
    %c0_2 = arith.constant 0 : index
    %1 = vector.load %arg2[%c0_1, %c0_2] : memref<128x256xbf16, #tpu.memory_space<vmem>>, vector<128x256xbf16>
    %cst = arith.constant dense<0.000000e+00> : vector<16x256xf32>
    %2 = tpu.matmul %0, %1, %cst {dimension_numbers = #tpu.dot_dimension_numbers<[1], [0], [0], [1], [0, 0, 1, 1], [], []>} : vector<16x128xbf16>, vector<128x256xbf16>, vector<16x256xf32> -> vector<16x256xf32>
    %c0_3 = arith.constant 0 : index
    %c0_4 = arith.constant 0 : index
    %3 = vector.load %arg3[%c0_3, %c0_4] : memref<1x256xf32, #tpu.memory_space<vmem>>, vector<1x256xf32>
    %4 = vector.broadcast %3 : vector<1x256xf32> to vector<16x256xf32>
    %5 = arith.addf %2, %4 : vector<16x256xf32>
    %cst_5 = arith.constant 0.000000e+00 : f32
    %6 = vector.broadcast %cst_5 : f32 to vector<16x256xf32>
    %7 = arith.maximumf %5, %6 : vector<16x256xf32>
    %8 = arith.truncf %7 : vector<16x256xf32> to vector<16x256xbf16>
    %c0_6 = arith.constant 0 : index
    %c0_7 = arith.constant 0 : index
    %9 = vector.load %arg4[%c0_6, %c0_7] : memref<256x128xbf16, #tpu.memory_space<vmem>>, vector<256x128xbf16>
    %cst_8 = arith.constant dense<0.000000e+00> : vector<16x128xf32>
    %10 = tpu.matmul %8, %9, %cst_8 {dimension_numbers = #tpu.dot_dimension_numbers<[1], [0], [0], [1], [0, 0, 1, 1], [], []>} : vector<16x256xbf16>, vector<256x128xbf16>, vector<16x128xf32> -> vector<16x128xf32>
    %c0_9 = arith.constant 0 : index
    %c0_10 = arith.constant 0 : index
    %11 = vector.load %arg5[%c0_9, %c0_10] : memref<1x128xf32, #tpu.memory_space<vmem>>, vector<1x128xf32>
    %12 = vector.broadcast %11 : vector<1x128xf32> to vector<16x128xf32>
    %13 = arith.addf %10, %12 : vector<16x128xf32>
    %c0_11 = arith.constant 0 : index
    %c0_12 = arith.constant 0 : index
    %14 = vector.load %arg6[%c0_11, %c0_12] : memref<16x128xf32, #tpu.memory_space<vmem>>, vector<16x128xf32>
    tpu.vector_store %arg6[%c0_11, %c0_12], %13 {strides = array<i32>} : memref<16x128xf32, #tpu.memory_space<vmem>>, vector<16x128xf32>,
    return
  }
  func.func @transform_0(%arg0: i32) -> (i32, i32) {
    %c0_i32 = arith.constant 0 : i32
    %c0_i32_0 = arith.constant 0 : i32
    return %arg0, %c0_i32 : i32, i32
  }
  func.func @transform_1(%arg0: i32) -> (i32, i32) {
    %c0_i32 = arith.constant 0 : i32
    %c0_i32_0 = arith.constant 0 : i32
    %c0_i32_1 = arith.constant 0 : i32
    return %c0_i32, %c0_i32_0 : i32, i32
  }
  func.func @transform_2(%arg0: i32) -> (i32, i32) {
    %c0_i32 = arith.constant 0 : i32
    %c0_i32_0 = arith.constant 0 : i32
    %c0_i32_1 = arith.constant 0 : i32
    return %c0_i32, %c0_i32_0 : i32, i32
  }
  func.func @transform_3(%arg0: i32) -> (i32, i32) {
    %c0_i32 = arith.constant 0 : i32
    %c0_i32_0 = arith.constant 0 : i32
    %c0_i32_1 = arith.constant 0 : i32
    return %c0_i32, %c0_i32_0 : i32, i32
  }
  func.func @transform_4(%arg0: i32) -> (i32, i32) {
    %c0_i32 = arith.constant 0 : i32
    %c0_i32_0 = arith.constant 0 : i32
    %c0_i32_1 = arith.constant 0 : i32
    return %c0_i32, %c0_i32_0 : i32, i32
  }
  func.func @transform_5(%arg0: i32) -> (i32, i32) {
    %c0_i32 = arith.constant 0 : i32
    %c0_i32_0 = arith.constant 0 : i32
    return %arg0, %c0_i32 : i32, i32
  }
}

</mosaic_0001>

<llo_original>
// kernel: simple_fc_policy_forward.1
$region0: #{simple_fc_policy_forward.1}
  #allocation0 [shape = 'u32[]', space=smem, size = 0x4, offset = 0x4, fixed_abs, tag = 'smem constant byte address 0x4 - core index']
  #allocation1 [shape = 'u32[144,128]{1,0:T(1,128)}', space=vmem, size = 0x12000, scoped, tag = 'internal scratch']
  %s0 = inlined_call_operand.vmem [shape: bf16[16,128], index: 0, kind: input, shape index: {}]
  %s1 = inlined_call_operand.hbm [shape: bf16[128,256], index: 1, kind: input, shape index: {}]
  %s2 = inlined_call_operand.vmem [shape: f32[1,256], index: 2, kind: input, shape index: {}]
  %s3 = inlined_call_operand.hbm [shape: bf16[256,128], index: 3, kind: input, shape index: {}]
  %s4 = inlined_call_operand.vmem [shape: f32[1,128], index: 4, kind: input, shape index: {}]
  %s5 = inlined_call_operand.vmem [shape: f32[16,128], index: 5, kind: output, shape index: {}]
  %s6 = sld [smem:[#allocation0]]
  $region38: #{simple_fc_policy_forward.1} parent=0
    _
  %s8 = ssub.s32 1, %s6
  %s9 = scalar_select 0, %s8, %s6
  $region1: #{simple_fc_policy_forward.1} parent=0
    #allocation2 [shape = 'u8[65536]{0}', space=vmem, size = 0x10000, scoped, tag = 'input window, operand 1, single buffered']
    #allocation3 [shape = 's32[1]{0}', space=sflag, size = 0x4, scoped, tag = 'scoped memory for simple_fc_policy_forward.1']
    #allocation4 [shape = 'u8[65536]{0}', space=vmem, size = 0x10000, scoped, tag = 'input window, operand 3, single buffered']
    #allocation5 [shape = 's32[1]{0}', space=sflag, size = 0x4, scoped, tag = 'scoped memory for simple_fc_policy_forward.1']
    %10 = vsyncpa [#allocation3], 0
    %11 = vsyncpa [#allocation5], 0
    // Predicated region
    $region2: #{simple_fc_policy_forward.1} parent=1 // pred_check
      _
    $region3: #{simple_fc_policy_forward.1} parent=1 // pred_check_branch
      %13 = sbr.rel (0) target = $region5
    $region4: #{simple_fc_policy_forward.1} parent=1 // pred_region
      _
    $region5: #{simple_fc_policy_forward.1} parent=1 // pred_fallthru
      _
    // Predicated region
    $region6: #{simple_fc_policy_forward.1} parent=1 // pred_check
      _
    $region7: #{simple_fc_policy_forward.1} parent=1 // pred_check_branch
      %15 = sbr.rel (0) target = $region9
    $region8: #{simple_fc_policy_forward.1} parent=1 // pred_region
      %s17 = ssub.s32 2048, 2048
      %18 = vsyncadd [#allocation3], %s17
      %s19 = sshll.u32 [#allocation2], 4
      %s20 = int_to_ptr.vmem [resolvable:$true] %s19
      %25 = dma.hbm_to_vmem [thread:$0]  %s1, 2048, %s20, [#allocation3], 128, 128, 8
    $region9: #{simple_fc_policy_forward.1} parent=1 // pred_fallthru
      _
    // Predicated region
    $region10: #{simple_fc_policy_forward.1} parent=1 // pred_check
      _
    $region11: #{simple_fc_policy_forward.1} parent=1 // pred_check_branch
      %27 = sbr.rel (0) target = $region13
    $region12: #{simple_fc_policy_forward.1} parent=1 // pred_region
      _
    $region13: #{simple_fc_policy_forward.1} parent=1 // pred_fallthru
      _
    // Predicated region
    $region14: #{simple_fc_policy_forward.1} parent=1 // pred_check
      _
    $region15: #{simple_fc_policy_forward.1} parent=1 // pred_check_branch
      %29 = sbr.rel (0) target = $region17
    $region16: #{simple_fc_policy_forward.1} parent=1 // pred_region
      %s31 = ssub.s32 2048, 2048
      %32 = vsyncadd [#allocation5], %s31
      %s33 = sshll.u32 [#allocation4], 4
      %s34 = int_to_ptr.vmem [resolvable:$true] %s33
      %39 = dma.hbm_to_vmem [thread:$0]  %s3, 2048, %s34, [#allocation5], 64, 64, 4
    $region17: #{simple_fc_policy_forward.1} parent=1 // pred_fallthru
      _
    // Predicated region
    $region18: #{simple_fc_policy_forward.1} parent=1 // pred_check
      _
    $region19: #{simple_fc_policy_forward.1} parent=1 // pred_check_branch
      %41 = sbr.rel (0) target = $region21
    $region20: #{simple_fc_policy_forward.1} parent=1 // pred_region
      _
    $region21: #{simple_fc_policy_forward.1} parent=1 // pred_fallthru
      _
    // Predicated region
    $region22: #{simple_fc_policy_forward.1} parent=1 // pred_check
      _
    $region23: #{simple_fc_policy_forward.1} parent=1 // pred_check_branch
      %43 = sbr.rel (0) target = $region25
    $region24: #{simple_fc_policy_forward.1} parent=1 // pred_region
      %44 = dma.done [#allocation3], 2048
    $region25: #{simple_fc_policy_forward.1} parent=1 // pred_fallthru
      _
    // Predicated region
    $region26: #{simple_fc_policy_forward.1} parent=1 // pred_check
      _
    $region27: #{simple_fc_policy_forward.1} parent=1 // pred_check_branch
      %46 = sbr.rel (0) target = $region29
    $region28: #{simple_fc_policy_forward.1} parent=1 // pred_region
      %47 = dma.done [#allocation5], 2048
    $region29: #{simple_fc_policy_forward.1} parent=1 // pred_fallthru
      _
    %v49 = vld [vmem:[%s0] sm:$0xf]
    %v50 = vld [vmem:[%s0 + $0x4] sm:$0xf]
    %v51 = vld [vmem:[#allocation2] sm:$0xff]
    %v52 = vld [vmem:[#allocation2 + $0x8] sm:$0xff]
    %v53 = vld [vmem:[#allocation2 + $0x10] sm:$0xff]
    %v54 = vld [vmem:[#allocation2 + $0x18] sm:$0xff]
    %v55 = vld [vmem:[#allocation2 + $0x20] sm:$0xff]
    %v56 = vld [vmem:[#allocation2 + $0x28] sm:$0xff]
    %v57 = vld [vmem:[#allocation2 + $0x30] sm:$0xff]
    %v58 = vld [vmem:[#allocation2 + $0x38] sm:$0xff]
    %v59 = vld [vmem:[#allocation2 + $0x40] sm:$0xff]
    %v60 = vld [vmem:[#allocation2 + $0x48] sm:$0xff]
    %v61 = vld [vmem:[#allocation2 + $0x50] sm:$0xff]
    %v62 = vld [vmem:[#allocation2 + $0x58] sm:$0xff]
    %v63 = vld [vmem:[#allocation2 + $0x60] sm:$0xff]
    %v64 = vld [vmem:[#allocation2 + $0x68] sm:$0xff]
    %v65 = vld [vmem:[#allocation2 + $0x70] sm:$0xff]
    %v66 = vld [vmem:[#allocation2 + $0x78] sm:$0xff]
    %v67 = vld [vmem:[%s2] sm:$0x3]
    %v69 = vlaneseq
    %v70 = vshrl.u32 %v69, 7
    %v71 = vsub.s32 0, %v70
    %v72 = vrot.slane %v67, %v71
    %v73 = vlaneseq
    %v74 = vshrl.u32 %v73, 7
    %v75 = vsub.s32 1, %v74
    %v76 = vrot.slane %v67, %v75
    %v81 = vunpack.c.l.b16 %v49
    %v82 = vunpack.c.l.b16 %v50
    %v83 = vpack.c.b16 %v82, %v81
    %v101 = vunpack.c.l.b16 %v51
    %v102 = vunpack.c.h.b16 %v51
    %v103 = vunpack.c.l.b16 %v52
    %v104 = vunpack.c.h.b16 %v52
    %v105 = vunpack.c.l.b16 %v53
    %v106 = vunpack.c.h.b16 %v53
    %v107 = vunpack.c.l.b16 %v54
    %v108 = vunpack.c.h.b16 %v54
    %v109 = vunpack.c.l.b16 %v55
    %v110 = vunpack.c.h.b16 %v55
    %v111 = vunpack.c.l.b16 %v56
    %v112 = vunpack.c.h.b16 %v56
    %v113 = vunpack.c.l.b16 %v57
    %v114 = vunpack.c.h.b16 %v57
    %v115 = vunpack.c.l.b16 %v58
    %v116 = vunpack.c.h.b16 %v58
    %v117 = vunpack.c.l.b16 %v59
    %v118 = vunpack.c.h.b16 %v59
    %v119 = vunpack.c.l.b16 %v60
    %v120 = vunpack.c.h.b16 %v60
    %v121 = vunpack.c.l.b16 %v61
    %v122 = vunpack.c.h.b16 %v61
    %v123 = vunpack.c.l.b16 %v62
    %v124 = vunpack.c.h.b16 %v62
    %v125 = vunpack.c.l.b16 %v63
    %v126 = vunpack.c.h.b16 %v63
    %v127 = vunpack.c.l.b16 %v64
    %v128 = vunpack.c.h.b16 %v64
    %v129 = vunpack.c.l.b16 %v65
    %v130 = vunpack.c.h.b16 %v65
    %v131 = vunpack.c.l.b16 %v66
    %v132 = vunpack.c.h.b16 %v66
    %v133 = vpack.c.b16 %v103, %v101
    %v134 = vpack.c.b16 %v104, %v102
    %v135 = vpack.c.b16 %v107, %v105
    %v136 = vpack.c.b16 %v108, %v106
    %v137 = vpack.c.b16 %v111, %v109
    %v138 = vpack.c.b16 %v112, %v110
    %v139 = vpack.c.b16 %v115, %v113
    %v140 = vpack.c.b16 %v116, %v114
    %v141 = vpack.c.b16 %v119, %v117
    %v142 = vpack.c.b16 %v120, %v118
    %v143 = vpack.c.b16 %v123, %v121
    %v144 = vpack.c.b16 %v124, %v122
    %v145 = vpack.c.b16 %v127, %v125
    %v146 = vpack.c.b16 %v128, %v126
    %v147 = vpack.c.b16 %v131, %v129
    %v148 = vpack.c.b16 %v132, %v130
    %165 = vmatprep.subr.bf16.mxu0 %v134
    %166 = vmatpush1.bf16.msra.mxu0 %v133
    %167 = vmatprep.subr.bf16.mxu0 %v136
    %168 = vmatpush1.bf16.msra.mxu0 %v135
    %169 = vmatprep.subr.bf16.mxu0 %v138
    %170 = vmatpush1.bf16.msra.mxu0 %v137
    %171 = vmatprep.subr.bf16.mxu0 %v140
    %172 = vmatpush1.bf16.msra.mxu0 %v139
    %173 = vmatprep.subr.bf16.mxu0 %v142
    %174 = vmatpush1.bf16.msra.mxu0 %v141
    %175 = vmatprep.subr.bf16.mxu0 %v144
    %176 = vmatpush1.bf16.msra.mxu0 %v143
    %177 = vmatprep.subr.bf16.mxu0 %v146
    %178 = vmatpush1.bf16.msra.mxu0 %v145
    %179 = vmatprep.subr.bf16.mxu0 %v148
    %180 = vmatpush1.bf16.msra.mxu0 %v147
    %181 = vmatprep.subr.bf16.mxu0 0
    %182 = vmatpush1.bf16.msra.mxu0 0
    %183 = vmatprep.subr.bf16.mxu0 0
    %184 = vmatpush1.bf16.msra.mxu0 0
    %185 = vmatprep.subr.bf16.mxu0 0
    %186 = vmatpush1.bf16.msra.mxu0 0
    %187 = vmatprep.subr.bf16.mxu0 0
    %188 = vmatpush1.bf16.msra.mxu0 0
    %189 = vmatprep.subr.bf16.mxu0 0
    %190 = vmatpush1.bf16.msra.mxu0 0
    %191 = vmatprep.subr.bf16.mxu0 0
    %192 = vmatpush1.bf16.msra.mxu0 0
    %193 = vmatprep.subr.bf16.mxu0 0
    %194 = vmatpush1.bf16.msra.mxu0 0
    %195 = vmatprep.subr.bf16.mxu0 0
    %196 = vmatpush1.bf16.msra.mxu0 0
    %197 = vmatprep.mubr.bf16.mxu0 0
    %198 = vmatmul.mubr.bf16.gmra.mrb[0].mxu0 %v83
    %v199 = vpop.f32.mrb[0].mxu0
    %v200 = vadd.f32 %v72, %v199
    %v201 = vpop.f32.mrb[0].mxu0
    %v202 = vadd.f32 %v76, %v201
    %v203 = vpop.f32.mrb[0].mxu0
    %v204 = vadd.f32 %v72, %v203
    %v205 = vpop.f32.mrb[0].mxu0
    %v206 = vadd.f32 %v76, %v205
    %207 = vdwg.mxu0
    %v208 = vmax.f32 %v200, 0.0
    %v209 = vmax.f32 %v202, 0.0
    %v210 = vmax.f32 %v204, 0.0
    %v211 = vmax.f32 %v206, 0.0
    %v212 = vpack.c.bf16 %v210, %v208
    %v213 = vpack.c.bf16 %v211, %v209
    %v214 = vld [vmem:[#allocation4] sm:$0xf]
    %v215 = vld [vmem:[#allocation4 + $0x4] sm:$0xf]
    %v216 = vld [vmem:[#allocation4 + $0x8] sm:$0xf]
    %v217 = vld [vmem:[#allocation4 + $0xc] sm:$0xf]
    %v218 = vld [vmem:[#allocation4 + $0x10] sm:$0xf]
    %v219 = vld [vmem:[#allocation4 + $0x14] sm:$0xf]
    %v220 = vld [vmem:[#allocation4 + $0x18] sm:$0xf]
    %v221 = vld [vmem:[#allocation4 + $0x1c] sm:$0xf]
    %v222 = vld [vmem:[#allocation4 + $0x20] sm:$0xf]
    %v223 = vld [vmem:[#allocation4 + $0x24] sm:$0xf]
    %v224 = vld [vmem:[#allocation4 + $0x28] sm:$0xf]
    %v225 = vld [vmem:[#allocation4 + $0x2c] sm:$0xf]
    %v226 = vld [vmem:[#allocation4 + $0x30] sm:$0xf]
    %v227 = vld [vmem:[#allocation4 + $0x34] sm:$0xf]
    %v228 = vld [vmem:[#allocation4 + $0x38] sm:$0xf]
    %v229 = vld [vmem:[#allocation4 + $0x3c] sm:$0xf]
    %v230 = vld [vmem:[#allocation4 + $0x40] sm:$0xf]
    %v231 = vld [vmem:[#allocation4 + $0x44] sm:$0xf]
    %v232 = vld [vmem:[#allocation4 + $0x48] sm:$0xf]
    %v233 = vld [vmem:[#allocation4 + $0x4c] sm:$0xf]
    %v234 = vld [vmem:[#allocation4 + $0x50] sm:$0xf]
    %v235 = vld [vmem:[#allocation4 + $0x54] sm:$0xf]
    %v236 = vld [vmem:[#allocation4 + $0x58] sm:$0xf]
    %v237 = vld [vmem:[#allocation4 + $0x5c] sm:$0xf]
    %v238 = vld [vmem:[#allocation4 + $0x60] sm:$0xf]
    %v239 = vld [vmem:[#allocation4 + $0x64] sm:$0xf]
    %v240 = vld [vmem:[#allocation4 + $0x68] sm:$0xf]
    %v241 = vld [vmem:[#allocation4 + $0x6c] sm:$0xf]
    %v242 = vld [vmem:[#allocation4 + $0x70] sm:$0xf]
    %v243 = vld [vmem:[#allocation4 + $0x74] sm:$0xf]
    %v244 = vld [vmem:[#allocation4 + $0x78] sm:$0xf]
    %v245 = vld [vmem:[#allocation4 + $0x7c] sm:$0xf]
    %v246 = vld [vmem:[%s4] sm:$0x1]
    %v248 = vlaneseq
    %v249 = vshrl.u32 %v248, 7
    %v250 = vsub.s32 0, %v249
    %v251 = vrot.slane %v246, %v250
    %v285 = vunpack.c.l.b16 %v214
    %v286 = vunpack.c.l.b16 %v215
    %v287 = vunpack.c.l.b16 %v216
    %v288 = vunpack.c.l.b16 %v217
    %v289 = vunpack.c.l.b16 %v218
    %v290 = vunpack.c.l.b16 %v219
    %v291 = vunpack.c.l.b16 %v220
    %v292 = vunpack.c.l.b16 %v221
    %v293 = vunpack.c.l.b16 %v222
    %v294 = vunpack.c.l.b16 %v223
    %v295 = vunpack.c.l.b16 %v224
    %v296 = vunpack.c.l.b16 %v225
    %v297 = vunpack.c.l.b16 %v226
    %v298 = vunpack.c.l.b16 %v227
    %v299 = vunpack.c.l.b16 %v228
    %v300 = vunpack.c.l.b16 %v229
    %v301 = vunpack.c.l.b16 %v230
    %v302 = vunpack.c.l.b16 %v231
    %v303 = vunpack.c.l.b16 %v232
    %v304 = vunpack.c.l.b16 %v233
    %v305 = vunpack.c.l.b16 %v234
    %v306 = vunpack.c.l.b16 %v235
    %v307 = vunpack.c.l.b16 %v236
    %v308 = vunpack.c.l.b16 %v237
    %v309 = vunpack.c.l.b16 %v238
    %v310 = vunpack.c.l.b16 %v239
    %v311 = vunpack.c.l.b16 %v240
    %v312 = vunpack.c.l.b16 %v241
    %v313 = vunpack.c.l.b16 %v242
    %v314 = vunpack.c.l.b16 %v243
    %v315 = vunpack.c.l.b16 %v244
    %v316 = vunpack.c.l.b16 %v245
    %v317 = vpack.c.b16 %v286, %v285
    %v318 = vpack.c.b16 %v288, %v287
    %v319 = vpack.c.b16 %v290, %v289
    %v320 = vpack.c.b16 %v292, %v291
    %v321 = vpack.c.b16 %v294, %v293
    %v322 = vpack.c.b16 %v296, %v295
    %v323 = vpack.c.b16 %v298, %v297
    %v324 = vpack.c.b16 %v300, %v299
    %v325 = vpack.c.b16 %v302, %v301
    %v326 = vpack.c.b16 %v304, %v303
    %v327 = vpack.c.b16 %v306, %v305
    %v328 = vpack.c.b16 %v308, %v307
    %v329 = vpack.c.b16 %v310, %v309
    %v330 = vpack.c.b16 %v312, %v311
    %v331 = vpack.c.b16 %v314, %v313
    %v332 = vpack.c.b16 %v316, %v315
    %349 = vmatprep.subr.bf16.mxu0 0
    %350 = vmatpush1.bf16.msra.mxu0 %v317
    %351 = vmatprep.subr.bf16.mxu0 0
    %352 = vmatpush1.bf16.msra.mxu0 %v318
    %353 = vmatprep.subr.bf16.mxu0 0
    %354 = vmatpush1.bf16.msra.mxu0 %v319
    %355 = vmatprep.subr.bf16.mxu0 0
    %356 = vmatpush1.bf16.msra.mxu0 %v320
    %357 = vmatprep.subr.bf16.mxu0 0
    %358 = vmatpush1.bf16.msra.mxu0 %v321
    %359 = vmatprep.subr.bf16.mxu0 0
    %360 = vmatpush1.bf16.msra.mxu0 %v322
    %361 = vmatprep.subr.bf16.mxu0 0
    %362 = vmatpush1.bf16.msra.mxu0 %v323
    %363 = vmatprep.subr.bf16.mxu0 0
    %364 = vmatpush1.bf16.msra.mxu0 %v324
    %365 = vmatprep.subr.bf16.mxu0 0
    %366 = vmatpush1.bf16.msra.mxu0 %v325
    %367 = vmatprep.subr.bf16.mxu0 0
    %368 = vmatpush1.bf16.msra.mxu0 %v326
    %369 = vmatprep.subr.bf16.mxu0 0
    %370 = vmatpush1.bf16.msra.mxu0 %v327
    %371 = vmatprep.subr.bf16.mxu0 0
    %372 = vmatpush1.bf16.msra.mxu0 %v328
    %373 = vmatprep.subr.bf16.mxu0 0
    %374 = vmatpush1.bf16.msra.mxu0 %v329
    %375 = vmatprep.subr.bf16.mxu0 0
    %376 = vmatpush1.bf16.msra.mxu0 %v330
    %377 = vmatprep.subr.bf16.mxu0 0
    %378 = vmatpush1.bf16.msra.mxu0 %v331
    %379 = vmatprep.subr.bf16.mxu0 0
    %380 = vmatpush1.bf16.msra.mxu0 %v332
    %381 = vmatprep.mubr.bf16.mxu0 %v213
    %382 = vmatmul.mubr.bf16.gmra.mrb[0].mxu0 %v212
    %v383 = vpop.f32.mrb[0].mxu0
    %v384 = vadd.f32 %v251, %v383
    %v385 = vpop.f32.mrb[0].mxu0
    %v386 = vpop.f32.mrb[0].mxu0
    %v387 = vadd.f32 %v251, %v386
    %v388 = vpop.f32.mrb[0].mxu0
    %389 = vdwg.mxu0
    %390 = vst [vmem:[%s5] sm:$0xff] %v384
    %391 = vst [vmem:[%s5 + $0x8] sm:$0xff] %v387
    // Predicated region
    $region30: #{simple_fc_policy_forward.1} parent=1 // pred_check
      _
    $region31: #{simple_fc_policy_forward.1} parent=1 // pred_check_branch
      %393 = sbr.rel (0) target = $region33
    $region32: #{simple_fc_policy_forward.1} parent=1 // pred_region
      _
    $region33: #{simple_fc_policy_forward.1} parent=1 // pred_fallthru
      _
    // Predicated region
    $region34: #{simple_fc_policy_forward.1} parent=1 // pred_check
      _
    $region35: #{simple_fc_policy_forward.1} parent=1 // pred_check_branch
      %395 = sbr.rel (0) target = $region37
    $region36: #{simple_fc_policy_forward.1} parent=1 // pred_region
      _
    $region37: #{simple_fc_policy_forward.1} parent=1 // pred_fallthru
      _
    %396 = vsyncpa [#allocation3], 1
    %397 = vsyncpa [#allocation5], 1

</llo_original>
